<compile_context>
chip_gen: v5e
topology: v5e:2x2
jax: 0.10.0
libtpu: 0.0.40
codegen_flags: <defaults>
</compile_context>

<pallas_src>
import functools
import math

import jax
import jax.numpy as jnp
from jax.experimental import pallas as pl
from jax.experimental.pallas import tpu as pltpu


_LANE_TILE_MAX = 2048              # lanes per block (multiple of 128)
_BLOCK_TARGET_BYTES = 2 << 20      # ~2 MiB / array / block; 3 arrays x 2 bufs = 12 MiB
_SMALL_FALLBACK_ELEMS = 32 * 1024  # below this, plain JAX (fusion + no launch overhead)


# ----------------------------- kernels --------------------------------------

def _affine_kernel(x_ref, y_ref, o_ref, *, alpha, beta):
    # o = alpha * x + beta * y   (elementwise, VPU only; f32 math)
    x = x_ref[...].astype(jnp.float32)
    y = y_ref[...].astype(jnp.float32)
    o_ref[...] = (alpha * x + beta * y).astype(o_ref.dtype)


def _add_kernel(x_ref, y_ref, o_ref):
    # alpha == 1, beta == 1: skip the constant multiplies entirely.
    x = x_ref[...].astype(jnp.float32)
    y = y_ref[...].astype(jnp.float32)
    o_ref[...] = (x + y).astype(o_ref.dtype)


def _scale_kernel(v_ref, o_ref, *, scale):
    # Single-stream path (alpha == 0 -> v is y; beta == 0 -> v is x).
    o_ref[...] = (scale * v_ref[...].astype(jnp.float32)).astype(o_ref.dtype)


# ----------------------------- tiling helpers -------------------------------

def _sublane_align(dtype):
    # Native packed sublane tile: f32 -> 8, bf16 -> 16, int8/fp8 -> 32.
    return 8 * max(1, 4 // jnp.dtype(dtype).itemsize)


def _lane_tile(cols):
    # cols is guaranteed to be a multiple of 128.  Largest 128-multiple
    # <= _LANE_TILE_MAX that divides cols -> lane stores are always unmasked.
    c = min(cols, _LANE_TILE_MAX)
    c -= c % 128
    while cols % c:
        c -= 128
    return c


def _row_tile(rows, lane_tile, itemsize, align):
    # Largest aligned row tile that keeps the block near the byte target.
    # A ragged final block (masked store) is far cheaper than shrinking every
    # block to an exact divisor.
    target = max(align, _BLOCK_TARGET_BYTES // (lane_tile * itemsize))
    if rows <= target:
        return rows                      # full extent is always a legal block dim
    return (target // align) * align


def _elementwise_2d(kernel, arrays, out_dtype, *, alias_input=None):
    """Run an elementwise kernel over equally-shaped 2-D arrays."""
    rows, cols = arrays[0].shape
    itemsize = max(jnp.dtype(a.dtype).itemsize for a in arrays)
    align = max(_sublane_align(a.dtype) for a in arrays)
    tl = _lane_tile(cols)
    tm = _row_tile(rows, tl, itemsize, align)
    grid = (pl.cdiv(rows, tm), pl.cdiv(cols, tl))
    spec = pl.BlockSpec((tm, tl), lambda i, j: (i, j))

    kwargs = {}
    if alias_input is not None:
        kwargs["input_output_aliases"] = {alias_input: 0}

    # TODO(synk): use pltpu.CORE_PARALLEL on the row axis for v7x (2 TCs/chip);
    # "parallel" vs "arbitrary" is measured neutral on single-TC chips.
    return pl.pallas_call(
        kernel,
        out_shape=jax.ShapeDtypeStruct((rows, cols), out_dtype),
        grid=grid,
        in_specs=[spec] * len(arrays),
        out_specs=spec,
        compiler_params=pltpu.CompilerParams(
            dimension_semantics=("parallel", "parallel")),
        **kwargs,
    )(*arrays)


# ----------------------------- forward --------------------------------------

def _plain(x, y, alpha, beta):
    out = beta * y if beta != 1.0 else y
    if alpha:
        out = (alpha * x if alpha != 1.0 else x) + out
    return out


def residual_forward(x, y, *, alpha=1.0, beta=1.0, transposed=False,
                     use_pallas=None, donate_y=False):
    """Forward of Residual(i_layer, d_input, d_model, alpha, beta).

    alpha/beta must be static Python scalars (module attributes), not traced
    JAX values.  `use_pallas=None` auto-selects (plain JAX for tiny tensors);
    True/False force the path.  `donate_y=True` aliases y to the output buffer
    (only safe if the caller no longer needs y).
    """
    del transposed                       # elementwise -> layout-irrelevant
    alpha = float(alpha)                 # raises clearly if a traced value sneaks in
    beta = float(beta)

    # Structural fast paths (no data movement at all).
    if alpha == 0.0 and beta == 1.0:
        return y
    if alpha == 0.0 and beta == 0.0:
        return jnp.zeros_like(y)

    out_dtype = y.dtype
    shape = y.shape
    total = math.prod(shape) if shape else 1

    if use_pallas is None:
        use_pallas = total >= _SMALL_FALLBACK_ELEMS
    if not use_pallas or total == 0:
        return _plain(x, y, alpha, beta).astype(out_dtype)

    # Pick the kernel + the HBM streams it actually needs.
    if alpha == 0.0:
        ops, kern, y_idx = [y], functools.partial(_scale_kernel, scale=beta), 0
    elif beta == 0.0:
        # NOTE: assumes finite y (0.0 * y == 0.0); skips the y HBM stream.
        if alpha == 1.0 and x.dtype == out_dtype and x.shape == shape:
            return x
        ops, kern, y_idx = [x], functools.partial(_scale_kernel, scale=alpha), None
    elif alpha == 1.0 and beta == 1.0:
        ops, kern, y_idx = [x, y], _add_kernel, 1
    else:
        ops, kern, y_idx = [x, y], functools.partial(
            _affine_kernel, alpha=alpha, beta=beta), 1

    if alpha != 0.0:
        assert x.shape == shape, "Residual with alpha != 0 requires matching shapes"

    alias = y_idx if (donate_y and y_idx is not None) else None
    last = shape[-1] if shape else 1

    # Path A: trailing dim already lane-aligned -> merge leading dims (free).
    if last % 128 == 0 and last > 0:
        rows = total // last
        out = _elementwise_2d(kern, [o.reshape(rows, last) for o in ops],
                              out_dtype, alias_input=alias)
        return out.reshape(shape)

    # Path B: lane-dense flattening — view the whole tensor as (R, C) with C a
    # large multiple of 128 so every store is a full, unmasked vst.
    flat = [o.reshape(total) for o in ops]
    if total % 128 == 0:
        cols = _lane_tile(total)
        rows = total // cols
        out = _elementwise_2d(kern, [f.reshape(rows, cols) for f in flat],
                              out_dtype, alias_input=alias)
        return out.reshape(shape)

    # Ragged total: kernel on the 128-aligned prefix, <128-element tail in JAX.
    main = (total // 128) * 128
    if main == 0:
        return _plain(x, y, alpha, beta).astype(out_dtype)
    cols = _lane_tile(main)
    rows = main // cols
    head = _elementwise_2d(kern, [f[:main].reshape(rows, cols) for f in flat],
                           out_dtype)
    x_tail = x.reshape(total)[main:] if alpha != 0.0 else None
    y_tail = y.reshape(total)[main:]
    tail = _plain(x_tail, y_tail, alpha, beta).astype(out_dtype)
    return jnp.concatenate([head.reshape(main), tail]).reshape(shape)


# ----------------------------- demo / self-test ------------------------------

if __name__ == "__main__":
    key = jax.random.PRNGKey(0)

    # Residual(i_layer=1, d_input=4, d_model=4), transposed layout (B, D, L).
    B, D, L = 2, 4, 16
    kx, ky = jax.random.split(key, 2)
    x = jax.random.normal(kx, (B, D, L), dtype=jnp.float32)
    y = jax.random.normal(ky, (B, D, L), dtype=jnp.float32)

    # 1) standard residual (alpha=1, beta=1): add-only kernel, lane-dense view.
    out = jax.block_until_ready(residual_forward(
        x, y, alpha=1.0, beta=1.0, transposed=True, use_pallas=True))
    assert out.shape == x.shape and out.dtype == y.dtype
    assert jnp.allclose(out, x + y, atol=1e-6, rtol=1e-6), "mismatch (alpha=1, beta=1)"

    # 2) constant gate (alpha=0.5, beta=2.0): general affine kernel.
    out2 = jax.block_until_ready(residual_forward(
        x, y, alpha=0.5, beta=2.0, transposed=True, use_pallas=True))
    assert jnp.allclose(out2, 0.5 * x + 2.0 * y, atol=1e-5, rtol=1e-5), "mismatch (gated)"

    # 3) no residual (alpha=0, beta=0.5): scale-only kernel, x never DMA'd.
    out3 = jax.block_until_ready(residual_forward(
        x, y, alpha=0.0, beta=0.5, transposed=True, use_pallas=True))
    assert jnp.allclose(out3, 0.5 * y, atol=1e-6, rtol=1e-6), "mismatch (alpha=0)"

    # 4) lane-aligned last dim, bf16: merged-leading-dims path + dtype-aware tiles.
    B2, L2, D2 = 2, 8, 256
    kx2, ky2 = jax.random.split(jax.random.PRNGKey(1))
    x2 = jax.random.normal(kx2, (B2, L2, D2), dtype=jnp.bfloat16)
    y2 = jax.random.normal(ky2, (B2, L2, D2), dtype=jnp.bfloat16)
    out4 = jax.block_until_ready(residual_forward(
        x2, y2, alpha=1.0, beta=1.0, transposed=False, use_pallas=True))
    ref4 = (x2.astype(jnp.float32) + y2.astype(jnp.float32)).astype(jnp.bfloat16)
    assert out4.dtype == jnp.bfloat16
    assert jnp.allclose(out4.astype(jnp.float32), ref4.astype(jnp.float32),
                        atol=1e-2, rtol=1e-2), "mismatch (bf16 aligned)"

    # 5) ragged total (2*10*13 = 260): 128-aligned prefix via Pallas, tail in JAX.
    kx3, ky3 = jax.random.split(jax.random.PRNGKey(2))
    x3 = jax.random.normal(kx3, (2, 10, 13), dtype=jnp.float32)
    y3 = jax.random.normal(ky3, (2, 10, 13), dtype=jnp.float32)
    out5 = jax.block_until_ready(residual_forward(
        x3, y3, alpha=0.5, beta=2.0, transposed=True, use_pallas=True))
    assert jnp.allclose(out5, 0.5 * x3 + 2.0 * y3, atol=1e-5, rtol=1e-5), "mismatch (ragged)"

    # 6) auto path: tiny tensors fall back to fusable plain JAX.
    out6 = jax.block_until_ready(residual_forward(
        x, y, alpha=0.5, beta=2.0, transposed=True))
    assert jnp.allclose(out6, 0.5 * x + 2.0 * y, atol=1e-5, rtol=1e-5), "mismatch (auto)"

    print("KERNEL_OK")
</pallas_src>

<mosaic_0001>
module attributes {stable_mosaic.version = 11 : i64} {
  func.func @_add_kernel(%arg0: i32, %arg1: i32, %arg2: memref<1x128xf32, #tpu.memory_space<vmem>>, %arg3: memref<1x128xf32, #tpu.memory_space<vmem>>, %arg4: memref<1x128xf32, #tpu.memory_space<vmem>>) attributes {dimension_semantics = [#tpu.dimension_semantics<parallel>, #tpu.dimension_semantics<parallel>], iteration_bounds = array<i64: 1, 1>, scalar_prefetch = 0 : i64, scratch_operands = 0 : i64, tpu.core_type = #tpu.core_type<tc>, window_params = [{transform_indices = @transform_0, window_bounds = array<i64: 1, 128>}, {transform_indices = @transform_1, window_bounds = array<i64: 1, 128>}, {transform_indices = @transform_2, window_bounds = array<i64: 1, 128>}]} {
    %c0 = arith.constant 0 : index
    %c0_0 = arith.constant 0 : index
    %0 = vector.load %arg2[%c0, %c0_0] : memref<1x128xf32, #tpu.memory_space<vmem>>, vector<1x128xf32>
    %c0_1 = arith.constant 0 : index
    %c0_2 = arith.constant 0 : index
    %1 = vector.load %arg3[%c0_1, %c0_2] : memref<1x128xf32, #tpu.memory_space<vmem>>, vector<1x128xf32>
    %2 = arith.addf %0, %1 : vector<1x128xf32>
    %c0_3 = arith.constant 0 : index
    %c0_4 = arith.constant 0 : index
    %3 = vector.load %arg4[%c0_3, %c0_4] : memref<1x128xf32, #tpu.memory_space<vmem>>, vector<1x128xf32>
    tpu.vector_store %arg4[%c0_3, %c0_4], %2 {strides = array<i32>} : memref<1x128xf32, #tpu.memory_space<vmem>>, vector<1x128xf32>,
    return
  }
  func.func @transform_0(%arg0: i32, %arg1: i32) -> (i32, i32) {
    %c0_i32 = arith.constant 0 : i32
    return %arg0, %arg1 : i32, i32
  }
  func.func @transform_1(%arg0: i32, %arg1: i32) -> (i32, i32) {
    %c0_i32 = arith.constant 0 : i32
    return %arg0, %arg1 : i32, i32
  }
  func.func @transform_2(%arg0: i32, %arg1: i32) -> (i32, i32) {
    %c0_i32 = arith.constant 0 : i32
    return %arg0, %arg1 : i32, i32
  }
}

</mosaic_0001>

<llo_original>
// kernel: tpu_custom_call.1
$region0: #{tpu_custom_call.1}
  #allocation0 [shape = 'u32[]', space=smem, size = 0x4, offset = 0x4, fixed_abs, tag = 'smem constant byte address 0x4 - core index']
  #allocation1 [shape = 'u32[72,128]{1,0:T(1,128)}', space=vmem, size = 0x9000, scoped, tag = 'internal scratch']
  %s0 = inlined_call_operand.hbm [shape: f32[1,128], index: 0, kind: input, shape index: {}]
  %s1 = inlined_call_operand.hbm [shape: f32[1,128], index: 1, kind: input, shape index: {}]
  %s2 = inlined_call_operand.hbm [shape: f32[1,128], index: 2, kind: output, shape index: {}]
  %s3 = sld [smem:[#allocation0]]
  $region26: #{tpu_custom_call.1} parent=0
    _
  %s5 = ssub.s32 1, %s3
  %s6 = scalar_select 0, %s5, %s3
  $region1: #{tpu_custom_call.1} parent=0
    #allocation2 [shape = 'u8[512]{0}', space=vmem, size = 0x400, scoped, tag = 'input window, operand 0, single buffered']
    #allocation3 [shape = 's32[1]{0}', space=sflag, size = 0x4, scoped, tag = 'scoped memory for tpu_custom_call.1']
    #allocation4 [shape = 's32[1]{0}', space=sflag, size = 0x4, scoped, tag = 'scoped memory for tpu_custom_call.1']
    #allocation5 [shape = 'u8[512]{0}', space=vmem, size = 0x400, scoped, tag = 'input window, operand 1, single buffered']
    #allocation6 [shape = 's32[1]{0}', space=sflag, size = 0x4, scoped, tag = 'scoped memory for tpu_custom_call.1']
    #allocation7 [shape = 'u8[512]{0}', space=vmem, size = 0x400, scoped, tag = 'output window, operand 0, single buffered']
    %7 = vsyncpa [#allocation3], 0
    %8 = vsyncpa [#allocation6], 0
    %9 = vsyncpa [#allocation4], 0
    // Predicated region
    $region2: #{tpu_custom_call.1} parent=1 // pred_check
      _
    $region3: #{tpu_custom_call.1} parent=1 // pred_check_branch
      %11 = sbr.rel (0) target = $region5
    $region4: #{tpu_custom_call.1} parent=1 // pred_region
      %13 = vsyncadd [#allocation3], 0
      %s15 = sshll.u32 %s0, 4
      %s16 = int_to_ptr.hbm [resolvable:$true] %s15
      %s17 = sshll.u32 [#allocation2], 4
      %s18 = int_to_ptr.vmem [resolvable:$true] %s17
      %20 = dma.hbm_to_vmem [thread:$0]  %s16, 16, %s18, [#allocation3]
    $region5: #{tpu_custom_call.1} parent=1 // pred_fallthru
      _
    // Predicated region
    $region6: #{tpu_custom_call.1} parent=1 // pred_check
      _
    $region7: #{tpu_custom_call.1} parent=1 // pred_check_branch
      %22 = sbr.rel (0) target = $region9
    $region8: #{tpu_custom_call.1} parent=1 // pred_region
      %24 = vsyncadd [#allocation6], 0
      %s26 = sshll.u32 %s1, 4
      %s27 = int_to_ptr.hbm [resolvable:$true] %s26
      %s28 = sshll.u32 [#allocation5], 4
      %s29 = int_to_ptr.vmem [resolvable:$true] %s28
      %31 = dma.hbm_to_vmem [thread:$0]  %s27, 16, %s29, [#allocation6]
    $region9: #{tpu_custom_call.1} parent=1 // pred_fallthru
      _
    // Predicated region
    $region10: #{tpu_custom_call.1} parent=1 // pred_check
      _
    $region11: #{tpu_custom_call.1} parent=1 // pred_check_branch
      %33 = sbr.rel (0) target = $region13
    $region12: #{tpu_custom_call.1} parent=1 // pred_region
      %35 = dma.done [#allocation3], 16
    $region13: #{tpu_custom_call.1} parent=1 // pred_fallthru
      _
    // Predicated region
    $region14: #{tpu_custom_call.1} parent=1 // pred_check
      _
    $region15: #{tpu_custom_call.1} parent=1 // pred_check_branch
      %37 = sbr.rel (0) target = $region17
    $region16: #{tpu_custom_call.1} parent=1 // pred_region
      %39 = dma.done [#allocation6], 16
    $region17: #{tpu_custom_call.1} parent=1 // pred_fallthru
      _
    %v40 = vld [vmem:[#allocation2] sm:$0x1]
    %v41 = vld [vmem:[#allocation5] sm:$0x1]
    %v42 = vadd.f32 %v40, %v41
    %43 = vst [vmem:[#allocation7] sm:$0x1] %v42
    // Predicated region
    $region18: #{tpu_custom_call.1} parent=1 // pred_check
      _
    $region19: #{tpu_custom_call.1} parent=1 // pred_check_branch
      %45 = sbr.rel (0) target = $region21
    $region20: #{tpu_custom_call.1} parent=1 // pred_region
      %47 = vsyncadd [#allocation4], 0
      %s49 = sshll.u32 [#allocation7], 4
      %s50 = int_to_ptr.vmem [resolvable:$true] %s49
      %s51 = sshll.u32 %s2, 4
      %s52 = int_to_ptr.hbm [resolvable:$true] %s51
      %54 = dma.vmem_to_hbm [thread:$0]  %s50, 16, %s52, [#allocation4]
    $region21: #{tpu_custom_call.1} parent=1 // pred_fallthru
      _
    // Predicated region
    $region22: #{tpu_custom_call.1} parent=1 // pred_check
      _
    $region23: #{tpu_custom_call.1} parent=1 // pred_check_branch
      %56 = sbr.rel (0) target = $region25
    $region24: #{tpu_custom_call.1} parent=1 // pred_region
      %58 = dma.done [#allocation4], 16
    $region25: #{tpu_custom_call.1} parent=1 // pred_fallthru
      _
    %59 = vsyncpa [#allocation3], 1
    %60 = vsyncpa [#allocation6], 1
    %61 = vsyncpa [#allocation4], 1

</llo_original>
